<compile_context>
chip_gen: v7x
topology: tpu7x:2x2x1
jax: 0.10.0
libtpu: 0.0.40
codegen_flags: <defaults>
</compile_context>

<pallas_src>
import jax
import jax.numpy as jnp
from jax import lax
from jax.experimental import pallas as pl
from jax.experimental.pallas import tpu as pltpu


def net_kernel(x_ref, w_ref, b_ref, o_ref):
    # x_ref: (TB, C, L)     input tile, NCL layout (no wrapper transpose)
    # w_ref: (K, C, NCLS)   folded conv+fc weights (tap-major)
    # b_ref: (1, NCLS)      folded bias
    # o_ref: (TB, NCLS)     output tile
    x = x_ref[...].astype(jnp.float32)          # accumulate in f32 even for bf16 inputs
    w = w_ref[...]
    TB, C, L = x.shape
    K, _, NCLS = w.shape
    Lout = L - K + 1
    inv_lout = 1.0 / Lout

    acc = jnp.zeros((TB, NCLS), jnp.float32)
    for k in range(K):                          # K is a small static Python int (3)
        # per-tap temporal sum over the valid window: XLU lane reduction -> (TB, C)
        xsum_k = jnp.sum(x[:, :, k:k + Lout], axis=-1)
        acc = acc + jnp.dot(xsum_k, w[k], preferred_element_type=jnp.float32)

    o_ref[...] = (acc * inv_lout + b_ref[...]).astype(o_ref.dtype)


def _batch_tile(B, C, L, itemsize):
    """Pick a batch tile: whole batch if tiny, else a multiple of 8 whose per-buffer
    input tile stays <= ~8 MiB (safe for v7x 64 MiB VMEM with double buffering;
    v6e/v5e have 2x headroom)."""
    if B <= 8:
        return B
    budget = 8 << 20
    per_row = max(C * L * itemsize, 1)
    tb = min(B, max(8, budget // per_row))
    tb = max(8, (tb // 8) * 8)
    return min(tb, 1024)


def net_forward(x_ncl, w_conv, b_conv, w_fc, b_fc):
    """x_ncl: (B, C, L) PyTorch NCL layout. Returns (B, 2)."""
    B, C, L = x_ncl.shape
    O, _, K = w_conv.shape
    NCLS = w_fc.shape[0]
    Lout = L - K + 1

    # Fold the FC layer into the conv weights (static, constant-folded by XLA):
    #   W_eff[k] = w_conv[:, :, k].T @ w_fc.T   -> (K, C, NCLS)
    #   b_eff    = b_conv @ w_fc.T + b_fc       -> (1, NCLS)
    w_eff = jnp.einsum("ock,no->kcn", w_conv, w_fc).astype(jnp.float32)
    b_eff = (b_conv @ w_fc.T + b_fc).reshape(1, NCLS).astype(jnp.float32)

    tb = _batch_tile(B, C, L, jnp.dtype(x_ncl.dtype).itemsize)
    grid = (pl.cdiv(B, tb),)

    cost = pl.CostEstimate(
        flops=int(B * C * L * K + 2 * B * K * C * NCLS),
        transcendentals=0,
        bytes_accessed=int(B * C * L * jnp.dtype(x_ncl.dtype).itemsize
                           + w_eff.size * 4 + b_eff.size * 4 + B * NCLS * 4),
    )

    return pl.pallas_call(
        net_kernel,
        out_shape=jax.ShapeDtypeStruct((B, NCLS), jnp.float32),
        grid=grid,
        in_specs=[
            pl.BlockSpec((tb, C, L), lambda b: (b, 0, 0)),      # batch-tiled input
            pl.BlockSpec((K, C, NCLS), lambda b: (0, 0, 0)),    # folded weights (replicated)
            pl.BlockSpec((1, NCLS), lambda b: (0, 0)),          # folded bias (replicated)
        ],
        out_specs=pl.BlockSpec((tb, NCLS), lambda b: (b, 0)),
        compiler_params=pltpu.CompilerParams(
            dimension_semantics=("parallel",)),
        cost_estimate=cost,
    )(x_ncl, w_eff, b_eff)


def reference_forward(x_ncl, w_conv, b_conv, w_fc, b_fc):
    """Pure-JAX reference matching the PyTorch module semantics."""
    conv = lax.conv_general_dilated(
        x_ncl, w_conv, window_strides=(1,), padding="VALID",
        dimension_numbers=("NCH", "OIH", "NCH"))        # (B, 32, L-2)
    conv = conv + b_conv[None, :, None]
    pooled = jnp.mean(conv, axis=-1)                    # (B, 32) == AdaptiveAvgPool1d(1).squeeze(-1)
    return pooled @ w_fc.T + b_fc                       # (B, 2)


if __name__ == "__main__":
    # Small shapes consistent with the module: batch=2, n_channels=4, length=16.
    B, C_IN, L = 2, 4, 16
    C_OUT, KSZ, N_CLS = 32, 3, 2

    key = jax.random.PRNGKey(0)
    kx, kw1, kb1, kw2, kb2 = jax.random.split(key, 5)

    x = jax.random.normal(kx, (B, C_IN, L), dtype=jnp.float32)

    # Deterministic parameter init (uniform, PyTorch-like fan-in scaling).
    bound1 = 1.0 / (C_IN * KSZ) ** 0.5
    w_conv = jax.random.uniform(kw1, (C_OUT, C_IN, KSZ), jnp.float32, -bound1, bound1)
    b_conv = jax.random.uniform(kb1, (C_OUT,), jnp.float32, -bound1, bound1)

    bound2 = 1.0 / C_OUT ** 0.5
    w_fc = jax.random.uniform(kw2, (N_CLS, C_OUT), jnp.float32, -bound2, bound2)
    b_fc = jax.random.uniform(kb2, (N_CLS,), jnp.float32, -bound2, bound2)

    out = net_forward(x, w_conv, b_conv, w_fc, b_fc)
    jax.block_until_ready(out)

    ref = reference_forward(x, w_conv, b_conv, w_fc, b_fc)
    assert out.shape == (B, N_CLS), out.shape
    assert jnp.allclose(out, ref, atol=1e-5, rtol=1e-5), (out, ref)

    print("KERNEL_OK")
</pallas_src>

<mosaic_0001>
module attributes {stable_mosaic.version = 11 : i64} {
  func.func @net_kernel(%arg0: i32, %arg1: memref<2x4x16xf32, #tpu.memory_space<vmem>>, %arg2: memref<3x4x2xf32, #tpu.memory_space<vmem>>, %arg3: memref<1x2xf32, #tpu.memory_space<vmem>>, %arg4: memref<2x2xf32, #tpu.memory_space<vmem>>) attributes {dimension_semantics = [#tpu.dimension_semantics<parallel>], iteration_bounds = array<i64: 1>, scalar_prefetch = 0 : i64, scratch_operands = 0 : i64, tpu.core_type = #tpu.core_type<tc>, window_params = [{transform_indices = @transform_0, window_bounds = array<i64: 2, 4, 16>}, {pipeline_mode = #tpu.pipeline_mode<synchronous>, transform_indices = @transform_1, window_bounds = array<i64: 3, 4, 2>}, {pipeline_mode = #tpu.pipeline_mode<synchronous>, transform_indices = @transform_2, window_bounds = array<i64: 1, 2>}, {transform_indices = @transform_3, window_bounds = array<i64: 2, 2>}]} {
    %c0 = arith.constant 0 : index
    %c0_0 = arith.constant 0 : index
    %c0_1 = arith.constant 0 : index
    %0 = vector.load %arg1[%c0, %c0_0, %c0_1] : memref<2x4x16xf32, #tpu.memory_space<vmem>>, vector<2x4x16xf32>
    %c0_2 = arith.constant 0 : index
    %c0_3 = arith.constant 0 : index
    %c0_4 = arith.constant 0 : index
    %1 = vector.load %arg2[%c0_2, %c0_3, %c0_4] : memref<3x4x2xf32, #tpu.memory_space<vmem>>, vector<3x4x2xf32>
    %cst = arith.constant 0.000000e+00 : f32
    %2 = vector.broadcast %cst : f32 to vector<2x2xf32>
    %3 = vector.extract_strided_slice %0 {offsets = [0, 0, 0], sizes = [2, 4, 14], strides = [1, 1, 1]} : vector<2x4x16xf32> to vector<2x4x14xf32>
    %cst_5 = arith.constant dense<0.000000e+00> : vector<2x4xf32>
    %4 = vector.multi_reduction <add>, %3, %cst_5 [2] : vector<2x4x14xf32> to vector<2x4xf32>
    %5 = vector.extract_strided_slice %1 {offsets = [0, 0, 0], sizes = [1, 4, 2], strides = [1, 1, 1]} : vector<3x4x2xf32> to vector<1x4x2xf32>
    %6 = vector.shape_cast %5 : vector<1x4x2xf32> to vector<4x2xf32>
    %cst_6 = arith.constant dense<0.000000e+00> : vector<2x2xf32>
    %7 = tpu.matmul %4, %6, %cst_6 {dimension_numbers = #tpu.dot_dimension_numbers<[1], [0], [0], [1], [0, 0, 1, 1], [], []>} : vector<2x4xf32>, vector<4x2xf32>, vector<2x2xf32> -> vector<2x2xf32>
    %8 = arith.addf %2, %7 : vector<2x2xf32>
    %9 = vector.extract_strided_slice %0 {offsets = [0, 0, 1], sizes = [2, 4, 14], strides = [1, 1, 1]} : vector<2x4x16xf32> to vector<2x4x14xf32>
    %cst_7 = arith.constant dense<0.000000e+00> : vector<2x4xf32>
    %10 = vector.multi_reduction <add>, %9, %cst_7 [2] : vector<2x4x14xf32> to vector<2x4xf32>
    %11 = vector.extract_strided_slice %1 {offsets = [1, 0, 0], sizes = [1, 4, 2], strides = [1, 1, 1]} : vector<3x4x2xf32> to vector<1x4x2xf32>
    %12 = vector.shape_cast %11 : vector<1x4x2xf32> to vector<4x2xf32>
    %cst_8 = arith.constant dense<0.000000e+00> : vector<2x2xf32>
    %13 = tpu.matmul %10, %12, %cst_8 {dimension_numbers = #tpu.dot_dimension_numbers<[1], [0], [0], [1], [0, 0, 1, 1], [], []>} : vector<2x4xf32>, vector<4x2xf32>, vector<2x2xf32> -> vector<2x2xf32>
    %14 = arith.addf %8, %13 : vector<2x2xf32>
    %15 = vector.extract_strided_slice %0 {offsets = [0, 0, 2], sizes = [2, 4, 14], strides = [1, 1, 1]} : vector<2x4x16xf32> to vector<2x4x14xf32>
    %cst_9 = arith.constant dense<0.000000e+00> : vector<2x4xf32>
    %16 = vector.multi_reduction <add>, %15, %cst_9 [2] : vector<2x4x14xf32> to vector<2x4xf32>
    %17 = vector.extract_strided_slice %1 {offsets = [2, 0, 0], sizes = [1, 4, 2], strides = [1, 1, 1]} : vector<3x4x2xf32> to vector<1x4x2xf32>
    %18 = vector.shape_cast %17 : vector<1x4x2xf32> to vector<4x2xf32>
    %cst_10 = arith.constant dense<0.000000e+00> : vector<2x2xf32>
    %19 = tpu.matmul %16, %18, %cst_10 {dimension_numbers = #tpu.dot_dimension_numbers<[1], [0], [0], [1], [0, 0, 1, 1], [], []>} : vector<2x4xf32>, vector<4x2xf32>, vector<2x2xf32> -> vector<2x2xf32>
    %20 = arith.addf %14, %19 : vector<2x2xf32>
    %cst_11 = arith.constant 0.0714285746 : f32
    %21 = vector.broadcast %cst_11 : f32 to vector<2x2xf32>
    %22 = arith.mulf %20, %21 : vector<2x2xf32>
    %c0_12 = arith.constant 0 : index
    %c0_13 = arith.constant 0 : index
    %23 = vector.load %arg3[%c0_12, %c0_13] : memref<1x2xf32, #tpu.memory_space<vmem>>, vector<1x2xf32>
    %24 = vector.broadcast %23 : vector<1x2xf32> to vector<2x2xf32>
    %25 = arith.addf %22, %24 : vector<2x2xf32>
    %c0_14 = arith.constant 0 : index
    %c0_15 = arith.constant 0 : index
    %26 = vector.load %arg4[%c0_14, %c0_15] : memref<2x2xf32, #tpu.memory_space<vmem>>, vector<2x2xf32>
    tpu.vector_store %arg4[%c0_14, %c0_15], %25 {strides = array<i32>} : memref<2x2xf32, #tpu.memory_space<vmem>>, vector<2x2xf32>,
    return
  }
  func.func @transform_0(%arg0: i32) -> (i32, i32, i32) {
    %c0_i32 = arith.constant 0 : i32
    %c0_i32_0 = arith.constant 0 : i32
    %c0_i32_1 = arith.constant 0 : i32
    return %arg0, %c0_i32, %c0_i32_0 : i32, i32, i32
  }
  func.func @transform_1(%arg0: i32) -> (i32, i32, i32) {
    %c0_i32 = arith.constant 0 : i32
    %c0_i32_0 = arith.constant 0 : i32
    %c0_i32_1 = arith.constant 0 : i32
    %c0_i32_2 = arith.constant 0 : i32
    return %c0_i32, %c0_i32_0, %c0_i32_1 : i32, i32, i32
  }
  func.func @transform_2(%arg0: i32) -> (i32, i32) {
    %c0_i32 = arith.constant 0 : i32
    %c0_i32_0 = arith.constant 0 : i32
    %c0_i32_1 = arith.constant 0 : i32
    return %c0_i32, %c0_i32_0 : i32, i32
  }
  func.func @transform_3(%arg0: i32) -> (i32, i32) {
    %c0_i32 = arith.constant 0 : i32
    %c0_i32_0 = arith.constant 0 : i32
    return %arg0, %c0_i32 : i32, i32
  }
}

</mosaic_0001>

<llo_original>
// kernel: tpu_custom_call.1
$region0: #{tpu_custom_call.1}
  #allocation0 [shape = 'u32[]', space=smem, size = 0x4, offset = 0x4, fixed_abs, tag = 'smem constant byte address 0x4 - core index']
  #allocation1 [shape = 'u32[144,128]{1,0:T(1,128)}', space=vmem, size = 0x12000, scoped, tag = 'internal scratch']
  %s0 = inlined_call_operand.vmem [shape: f32[2,4,16], index: 0, kind: input, shape index: {}]
  %s1 = inlined_call_operand.vmem [shape: f32[3,4,2], index: 1, kind: input, shape index: {}]
  %s2 = inlined_call_operand.vmem [shape: f32[1,2], index: 2, kind: input, shape index: {}]
  %s3 = inlined_call_operand.hbm [shape: f32[2,2], index: 3, kind: output, shape index: {}]
  %s4 = sld [smem:[#allocation0]]
  $region22: #{tpu_custom_call.1} parent=0
    _
  %s6 = ssub.s32 1, %s4
  %s7 = scalar_select 0, %s6, %s4
  $region1: #{tpu_custom_call.1} parent=0
    #allocation2 [shape = 'u8[1024]{0}', space=vmem, size = 0x400, scoped, tag = 'output window, operand 0, single buffered']
    #allocation3 [shape = 's32[1]{0}', space=sflag, size = 0x4, scoped, tag = 'scoped memory for tpu_custom_call.1']
    %8 = vsyncpa [#allocation3], 0
    // Predicated region
    $region2: #{tpu_custom_call.1} parent=1 // pred_check
      _
    $region3: #{tpu_custom_call.1} parent=1 // pred_check_branch
      %10 = sbr.rel (0) target = $region5
    $region4: #{tpu_custom_call.1} parent=1 // pred_region
      _
    $region5: #{tpu_custom_call.1} parent=1 // pred_fallthru
      _
    // Predicated region
    $region6: #{tpu_custom_call.1} parent=1 // pred_check
      _
    $region7: #{tpu_custom_call.1} parent=1 // pred_check_branch
      %12 = sbr.rel (0) target = $region9
    $region8: #{tpu_custom_call.1} parent=1 // pred_region
      _
    $region9: #{tpu_custom_call.1} parent=1 // pred_fallthru
      _
    // Predicated region
    $region10: #{tpu_custom_call.1} parent=1 // pred_check
      _
    $region11: #{tpu_custom_call.1} parent=1 // pred_check_branch
      %14 = sbr.rel (0) target = $region13
    $region12: #{tpu_custom_call.1} parent=1 // pred_region
      _
    $region13: #{tpu_custom_call.1} parent=1 // pred_fallthru
      _
    %v15 = vld [vmem:[%s0] sm:$0xf]
    %v16 = vld [vmem:[%s0 + $0x4] sm:$0xf]
    %v17 = vld [vmem:[%s1] sm:$0xf]
    %v18 = vld [vmem:[%s1 + $0x4] sm:$0xf]
    %v19 = vld [vmem:[%s1 + $0x8] sm:$0xf]
    %vm20 = vcmask 109568
    %v21 = vsel %vm20, %v15, 0.0
    %22 = vadd.xlane.f32.xlu0 %v21
    %v23 = vpop.xlane.xlu0 %22
    %v24 = vsel %vm20, %v16, 0.0
    %25 = vadd.xlane.f32.xlu0 %v24
    %v26 = vpop.xlane.xlu0 %25
    %29 = vrot.lane.b32.xlu0 %v15, 127
    %v30 = vpop.permute.xlu0 %29
    %31 = vrot.lane.b32.xlu0 %v16, 127
    %v32 = vpop.permute.xlu0 %31
    %v35 = vsel %vm20, %v30, 0.0
    %36 = vadd.xlane.f32.xlu0 %v35
    %v37 = vpop.xlane.xlu0 %36
    %v38 = vsel %vm20, %v32, 0.0
    %39 = vadd.xlane.f32.xlu0 %v38
    %v40 = vpop.xlane.xlu0 %39
    %v43 = vlaneseq
    %v44 = vand.u32 %v43, 127
    %v45 = vlaneseq
    %v46 = vshrl.u32 %v45, 7
    %v47 = vsub.s32 %v44, %v46
    %v48 = vrot.slane %v37, %v47
    %v49 = vlaneseq
    %v50 = vshrl.u32 %v49, 7
    %v51 = vsub.s32 %v44, %v50
    %v52 = vrot.slane %v40, %v51
    %vm53 = vcmask 1041409
    %v54 = vsel %vm53, %v52, %v48
    %vm55 = vcmask 31744
    %v56 = vsel %vm55, %v54, 0
    %vm58 = vcmask 1043456
    %v60 = vsel %vm58, %v18, 0
    %62 = vmatprep.subr.mxu0 0.0
    %63 = vmatpush1.msra.mxu0 %v60
    %64 = vmatprep.subr.mxu0 0.0
    %65 = vmatpush1.msra.mxu0 0.0
    %66 = vmatprep.subr.mxu0 0.0
    %67 = vmatpush1.msra.mxu0 0.0
    %68 = vmatprep.subr.mxu0 0.0
    %69 = vmatpush1.msra.mxu0 0.0
    %70 = vmatprep.subr.mxu0 0.0
    %71 = vmatpush1.msra.mxu0 0.0
    %72 = vmatprep.subr.mxu0 0.0
    %73 = vmatpush1.msra.mxu0 0.0
    %74 = vmatprep.subr.mxu0 0.0
    %75 = vmatpush1.msra.mxu0 0.0
    %76 = vmatprep.subr.mxu0 0.0
    %77 = vmatpush1.msra.mxu0 0.0
    %78 = vmatprep.subr.mxu0 0.0
    %79 = vmatpush1.msra.mxu0 0.0
    %80 = vmatprep.subr.mxu0 0.0
    %81 = vmatpush1.msra.mxu0 0.0
    %82 = vmatprep.subr.mxu0 0.0
    %83 = vmatpush1.msra.mxu0 0.0
    %84 = vmatprep.subr.mxu0 0.0
    %85 = vmatpush1.msra.mxu0 0.0
    %86 = vmatprep.subr.mxu0 0.0
    %87 = vmatpush1.msra.mxu0 0.0
    %88 = vmatprep.subr.mxu0 0.0
    %89 = vmatpush1.msra.mxu0 0.0
    %90 = vmatprep.subr.mxu0 0.0
    %91 = vmatpush1.msra.mxu0 0.0
    %92 = vmatprep.subr.mxu0 0.0
    %93 = vmatpush1.msra.mxu0 0.0
    %94 = vmatprep.subr.mxu0 0.0
    %95 = vmatpush1.msra.mxu0 0.0
    %96 = vmatprep.subr.mxu0 0.0
    %97 = vmatpush1.msra.mxu0 0.0
    %98 = vmatprep.subr.mxu0 0.0
    %99 = vmatpush1.msra.mxu0 0.0
    %100 = vmatprep.subr.mxu0 0.0
    %101 = vmatpush1.msra.mxu0 0.0
    %102 = vmatprep.subr.mxu0 0.0
    %103 = vmatpush1.msra.mxu0 0.0
    %104 = vmatprep.subr.mxu0 0.0
    %105 = vmatpush1.msra.mxu0 0.0
    %106 = vmatprep.subr.mxu0 0.0
    %107 = vmatpush1.msra.mxu0 0.0
    %108 = vmatprep.subr.mxu0 0.0
    %109 = vmatpush1.msra.mxu0 0.0
    %110 = vmatprep.subr.mxu0 0.0
    %111 = vmatpush1.msra.mxu0 0.0
    %112 = vmatprep.subr.mxu0 0.0
    %113 = vmatpush1.msra.mxu0 0.0
    %114 = vmatprep.subr.mxu0 0.0
    %115 = vmatpush1.msra.mxu0 0.0
    %116 = vmatprep.subr.mxu0 0.0
    %117 = vmatpush1.msra.mxu0 0.0
    %118 = vmatprep.subr.mxu0 0.0
    %119 = vmatpush1.msra.mxu0 0.0
    %120 = vmatprep.subr.mxu0 0.0
    %121 = vmatpush1.msra.mxu0 0.0
    %122 = vmatprep.subr.mxu0 0.0
    %123 = vmatpush1.msra.mxu0 0.0
    %124 = vmatprep.subr.mxu0 0.0
    %125 = vmatpush1.msra.mxu0 0.0
    %126 = vmatprep.mubr.f32.mxu0 0.0
    %127 = vmatmul.mubr.f32.gmra.mrb[0].mxu0 %v56
    %v128 = vpop.f32.mrb[0].mxu0
    %v129 = vadd.f32 0.0, %v128
    %v130 = vpop.f32.mrb[0].mxu0
    %131 = vdwg.mxu0
    %v134 = vlaneseq
    %v135 = vshrl.u32 %v134, 7
    %v136 = vsub.s32 %v44, %v135
    %v137 = vrot.slane %v23, %v136
    %v138 = vlaneseq
    %v139 = vshrl.u32 %v138, 7
    %v140 = vsub.s32 %v44, %v139
    %v141 = vrot.slane %v26, %v140
    %v142 = vsel %vm53, %v141, %v137
    %v143 = vsel %vm55, %v142, 0
    %v146 = vsel %vm58, %v17, 0
    %148 = vmatprep.subr.mxu0 0.0
    %149 = vmatpush1.msra.mxu0 %v146
    %150 = vmatprep.subr.mxu0 0.0
    %151 = vmatpush1.msra.mxu0 0.0
    %152 = vmatprep.subr.mxu0 0.0
    %153 = vmatpush1.msra.mxu0 0.0
    %154 = vmatprep.subr.mxu0 0.0
    %155 = vmatpush1.msra.mxu0 0.0
    %156 = vmatprep.subr.mxu0 0.0
    %157 = vmatpush1.msra.mxu0 0.0
    %158 = vmatprep.subr.mxu0 0.0
    %159 = vmatpush1.msra.mxu0 0.0
    %160 = vmatprep.subr.mxu0 0.0
    %161 = vmatpush1.msra.mxu0 0.0
    %162 = vmatprep.subr.mxu0 0.0
    %163 = vmatpush1.msra.mxu0 0.0
    %164 = vmatprep.subr.mxu0 0.0
    %165 = vmatpush1.msra.mxu0 0.0
    %166 = vmatprep.subr.mxu0 0.0
    %167 = vmatpush1.msra.mxu0 0.0
    %168 = vmatprep.subr.mxu0 0.0
    %169 = vmatpush1.msra.mxu0 0.0
    %170 = vmatprep.subr.mxu0 0.0
    %171 = vmatpush1.msra.mxu0 0.0
    %172 = vmatprep.subr.mxu0 0.0
    %173 = vmatpush1.msra.mxu0 0.0
    %174 = vmatprep.subr.mxu0 0.0
    %175 = vmatpush1.msra.mxu0 0.0
    %176 = vmatprep.subr.mxu0 0.0
    %177 = vmatpush1.msra.mxu0 0.0
    %178 = vmatprep.subr.mxu0 0.0
    %179 = vmatpush1.msra.mxu0 0.0
    %180 = vmatprep.subr.mxu0 0.0
    %181 = vmatpush1.msra.mxu0 0.0
    %182 = vmatprep.subr.mxu0 0.0
    %183 = vmatpush1.msra.mxu0 0.0
    %184 = vmatprep.subr.mxu0 0.0
    %185 = vmatpush1.msra.mxu0 0.0
    %186 = vmatprep.subr.mxu0 0.0
    %187 = vmatpush1.msra.mxu0 0.0
    %188 = vmatprep.subr.mxu0 0.0
    %189 = vmatpush1.msra.mxu0 0.0
    %190 = vmatprep.subr.mxu0 0.0
    %191 = vmatpush1.msra.mxu0 0.0
    %192 = vmatprep.subr.mxu0 0.0
    %193 = vmatpush1.msra.mxu0 0.0
    %194 = vmatprep.subr.mxu0 0.0
    %195 = vmatpush1.msra.mxu0 0.0
    %196 = vmatprep.subr.mxu0 0.0
    %197 = vmatpush1.msra.mxu0 0.0
    %198 = vmatprep.subr.mxu0 0.0
    %199 = vmatpush1.msra.mxu0 0.0
    %200 = vmatprep.subr.mxu0 0.0
    %201 = vmatpush1.msra.mxu0 0.0
    %202 = vmatprep.subr.mxu0 0.0
    %203 = vmatpush1.msra.mxu0 0.0
    %204 = vmatprep.subr.mxu0 0.0
    %205 = vmatpush1.msra.mxu0 0.0
    %206 = vmatprep.subr.mxu0 0.0
    %207 = vmatpush1.msra.mxu0 0.0
    %208 = vmatprep.subr.mxu0 0.0
    %209 = vmatpush1.msra.mxu0 0.0
    %210 = vmatprep.subr.mxu0 0.0
    %211 = vmatpush1.msra.mxu0 0.0
    %212 = vmatprep.mubr.f32.mxu0 0.0
    %213 = vmatmul.mubr.f32.gmra.mrb[0].mxu0 %v143
    %v214 = vpop.f32.mrb[0].mxu0
    %v215 = vadd.f32 %v129, %v214
    %v216 = vpop.f32.mrb[0].mxu0
    %217 = vdwg.mxu0
    %218 = vrot.lane.b32.xlu0 %v15, 126
    %v219 = vpop.permute.xlu0 %218
    %220 = vrot.lane.b32.xlu0 %v16, 126
    %v221 = vpop.permute.xlu0 %220
    %v224 = vsel %vm20, %v219, 0.0
    %225 = vadd.xlane.f32.xlu0 %v224
    %v226 = vpop.xlane.xlu0 %225
    %v227 = vsel %vm20, %v221, 0.0
    %228 = vadd.xlane.f32.xlu0 %v227
    %v229 = vpop.xlane.xlu0 %228
    %v232 = vlaneseq
    %v233 = vshrl.u32 %v232, 7
    %v234 = vsub.s32 %v44, %v233
    %v235 = vrot.slane %v226, %v234
    %v236 = vlaneseq
    %v237 = vshrl.u32 %v236, 7
    %v238 = vsub.s32 %v44, %v237
    %v239 = vrot.slane %v229, %v238
    %v240 = vsel %vm53, %v239, %v235
    %v241 = vsel %vm55, %v240, 0
    %v244 = vsel %vm58, %v19, 0
    %246 = vmatprep.subr.mxu0 0.0
    %247 = vmatpush1.msra.mxu0 %v244
    %248 = vmatprep.subr.mxu0 0.0
    %249 = vmatpush1.msra.mxu0 0.0
    %250 = vmatprep.subr.mxu0 0.0
    %251 = vmatpush1.msra.mxu0 0.0
    %252 = vmatprep.subr.mxu0 0.0
    %253 = vmatpush1.msra.mxu0 0.0
    %254 = vmatprep.subr.mxu0 0.0
    %255 = vmatpush1.msra.mxu0 0.0
    %256 = vmatprep.subr.mxu0 0.0
    %257 = vmatpush1.msra.mxu0 0.0
    %258 = vmatprep.subr.mxu0 0.0
    %259 = vmatpush1.msra.mxu0 0.0
    %260 = vmatprep.subr.mxu0 0.0
    %261 = vmatpush1.msra.mxu0 0.0
    %262 = vmatprep.subr.mxu0 0.0
    %263 = vmatpush1.msra.mxu0 0.0
    %264 = vmatprep.subr.mxu0 0.0
    %265 = vmatpush1.msra.mxu0 0.0
    %266 = vmatprep.subr.mxu0 0.0
    %267 = vmatpush1.msra.mxu0 0.0
    %268 = vmatprep.subr.mxu0 0.0
    %269 = vmatpush1.msra.mxu0 0.0
    %270 = vmatprep.subr.mxu0 0.0
    %271 = vmatpush1.msra.mxu0 0.0
    %272 = vmatprep.subr.mxu0 0.0
    %273 = vmatpush1.msra.mxu0 0.0
    %274 = vmatprep.subr.mxu0 0.0
    %275 = vmatpush1.msra.mxu0 0.0
    %276 = vmatprep.subr.mxu0 0.0
    %277 = vmatpush1.msra.mxu0 0.0
    %278 = vmatprep.subr.mxu0 0.0
    %279 = vmatpush1.msra.mxu0 0.0
    %280 = vmatprep.subr.mxu0 0.0
    %281 = vmatpush1.msra.mxu0 0.0
    %282 = vmatprep.subr.mxu0 0.0
    %283 = vmatpush1.msra.mxu0 0.0
    %284 = vmatprep.subr.mxu0 0.0
    %285 = vmatpush1.msra.mxu0 0.0
    %286 = vmatprep.subr.mxu0 0.0
    %287 = vmatpush1.msra.mxu0 0.0
    %288 = vmatprep.subr.mxu0 0.0
    %289 = vmatpush1.msra.mxu0 0.0
    %290 = vmatprep.subr.mxu0 0.0
    %291 = vmatpush1.msra.mxu0 0.0
    %292 = vmatprep.subr.mxu0 0.0
    %293 = vmatpush1.msra.mxu0 0.0
    %294 = vmatprep.subr.mxu0 0.0
    %295 = vmatpush1.msra.mxu0 0.0
    %296 = vmatprep.subr.mxu0 0.0
    %297 = vmatpush1.msra.mxu0 0.0
    %298 = vmatprep.subr.mxu0 0.0
    %299 = vmatpush1.msra.mxu0 0.0
    %300 = vmatprep.subr.mxu0 0.0
    %301 = vmatpush1.msra.mxu0 0.0
    %302 = vmatprep.subr.mxu0 0.0
    %303 = vmatpush1.msra.mxu0 0.0
    %304 = vmatprep.subr.mxu0 0.0
    %305 = vmatpush1.msra.mxu0 0.0
    %306 = vmatprep.subr.mxu0 0.0
    %307 = vmatpush1.msra.mxu0 0.0
    %308 = vmatprep.subr.mxu0 0.0
    %309 = vmatpush1.msra.mxu0 0.0
    %310 = vmatprep.mubr.f32.mxu0 0.0
    %311 = vmatmul.mubr.f32.gmra.mrb[0].mxu0 %v241
    %v312 = vpop.f32.mrb[0].mxu0
    %v313 = vadd.f32 0.0, %v312
    %v314 = vpop.f32.mrb[0].mxu0
    %315 = vdwg.mxu0
    %v316 = vadd.f32 %v215, %v313
    %v317 = vmul.f32 %v316, 0.071428575
    %v318 = vld [vmem:[%s2] sm:$0x1]
    %v320 = vlaneseq
    %v321 = vshrl.u32 %v320, 7
    %v322 = vsub.s32 0, %v321
    %v323 = vrot.slane %v318, %v322
    %v325 = vadd.f32 %v317, %v323
    %vm326 = vcmask 9216
    %327 = vst.msk [vmem:[#allocation2] sm:$0x3] %vm326, %v325
    // Predicated region
    $region14: #{tpu_custom_call.1} parent=1 // pred_check
      _
    $region15: #{tpu_custom_call.1} parent=1 // pred_check_branch
      %329 = sbr.rel (0) target = $region17
    $region16: #{tpu_custom_call.1} parent=1 // pred_region
      %s331 = ssub.s32 32, 32
      %332 = vsyncadd [#allocation3], %s331
      %s334 = sshll.u32 [#allocation2], 4
      %s335 = int_to_ptr.vmem [resolvable:$true] %s334
      %337 = dma.vmem_to_hbm [thread:$0]  %s335, 32, %s3, [#allocation3]
    $region17: #{tpu_custom_call.1} parent=1 // pred_fallthru
      _
    // Predicated region
    $region18: #{tpu_custom_call.1} parent=1 // pred_check
      _
    $region19: #{tpu_custom_call.1} parent=1 // pred_check_branch
      %339 = sbr.rel (0) target = $region21
    $region20: #{tpu_custom_call.1} parent=1 // pred_region
      %340 = dma.done [#allocation3], 32
    $region21: #{tpu_custom_call.1} parent=1 // pred_fallthru
      _
    %341 = vsyncpa [#allocation3], 1

</llo_original>
